<compile_context>
chip_gen: v6e
topology: v6e:2x2x1
jax: 0.10.0
libtpu: 0.0.40
codegen_flags: <defaults>
</compile_context>

<pallas_src>
import functools

import jax
import jax.numpy as jnp
from jax.experimental import pallas as pl
from jax.experimental.pallas import tpu as pltpu


EMB_DIM = 768
HIDDEN = 256


def _round_up(x, m):
    return ((x + m - 1) // m) * m


def _mlp_ce_kernel(emb_ref, amt_ref, lbl_ref,
                   w1e_ref, w1a_ref, b1_ref, w2_ref, b2_ref,
                   logits_ref, loss_ref,
                   *, mean_amount, inv_std_amount):
    # normalize amount:  (amount - mean) / std   (f32, VPU)
    amt = (amt_ref[...] - mean_amount) * inv_std_amount            # [TB, 1]

    # fc1 on the concatenated [emb | amount] input, done as a split matmul.
    # emb/W1e are bf16 (native MXU dtype on v6e/v7x), accumulate in f32.
    h = jnp.dot(emb_ref[...], w1e_ref[...],
                preferred_element_type=jnp.float32)                 # [TB, 256] f32
    h = h + amt * w1a_ref[...] + b1_ref[...]
    h = jnp.maximum(h, 0.0)                                         # ReLU (f32)
    # Dropout(p=0.1): identity in eval mode.

    # fc2 on the class dim padded to 128 (lane-dense output, one MXU tile).
    # Padded class columns carry bias -1e30 so they never affect max/logsumexp.
    logits = jnp.dot(h.astype(jnp.bfloat16), w2_ref[...],
                     preferred_element_type=jnp.float32) + b2_ref[...]  # [TB, 128]
    logits_ref[...] = logits

    # per-row cross-entropy:  lse(logits) - logits[label]
    m = jnp.max(logits, axis=-1, keepdims=True)
    lse = jnp.log(jnp.sum(jnp.exp(logits - m), axis=-1, keepdims=True)) + m  # [TB,1]
    class_iota = jax.lax.broadcasted_iota(jnp.int32, logits.shape, 1)
    picked = jnp.sum(jnp.where(class_iota == lbl_ref[...], logits, 0.0),
                     axis=-1, keepdims=True)                        # [TB, 1]
    loss_ref[...] = lse - picked


def mlp_classifier(emb, amount, label, w1e, w1a, b1, w2, b2,
                   *, mean_amount, std_amount, tb=None):
    B = emb.shape[0]
    C = w2.shape[1]

    # batch tile: multiple of 8, capped so per-tile VMEM stays small even with
    # double-buffering (safe for v7x's 32 MiB scoped VMEM).
    if tb is None:
        tb = min(512, _round_up(B, 8))
    tb = _round_up(tb, 8)
    n_tiles = pl.cdiv(B, tb)
    b_pad = n_tiles * tb

    # class dimension padded to a lane-dense multiple of 128
    c_pad = max(128, _round_up(C, 128))
    w2p = jnp.zeros((HIDDEN, c_pad), jnp.float32).at[:, :C].set(w2)
    b2p = jnp.full((1, c_pad), -1e30, jnp.float32).at[:, :C].set(b2)

    # bf16 matmul operands (halves HBM->VMEM DMA; epilogue stays f32)
    emb_p = jnp.zeros((b_pad, EMB_DIM), jnp.bfloat16).at[:B].set(
        emb.astype(jnp.bfloat16))
    amt_p = jnp.zeros((b_pad, 1), jnp.float32).at[:B].set(
        amount.astype(jnp.float32))
    lbl_p = jnp.zeros((b_pad, 1), jnp.int32).at[:B].set(label.astype(jnp.int32))
    w1e_b = w1e.astype(jnp.bfloat16)
    w2p_b = w2p.astype(jnp.bfloat16)

    kernel = functools.partial(_mlp_ce_kernel,
                               mean_amount=float(mean_amount),
                               inv_std_amount=1.0 / float(std_amount))

    logits_p, loss_rows = pl.pallas_call(
        kernel,
        out_shape=(jax.ShapeDtypeStruct((b_pad, c_pad), jnp.float32),
                   jax.ShapeDtypeStruct((b_pad, 1), jnp.float32)),
        grid=(n_tiles,),
        in_specs=[
            pl.BlockSpec((tb, EMB_DIM), lambda i: (i, 0)),      # emb tile
            pl.BlockSpec((tb, 1), lambda i: (i, 0)),            # amount tile
            pl.BlockSpec((tb, 1), lambda i: (i, 0)),            # label tile
            pl.BlockSpec((EMB_DIM, HIDDEN), lambda i: (0, 0)),  # W1e (resident)
            pl.BlockSpec((1, HIDDEN), lambda i: (0, 0)),        # w1a (resident)
            pl.BlockSpec((1, HIDDEN), lambda i: (0, 0)),        # b1  (resident)
            pl.BlockSpec((HIDDEN, c_pad), lambda i: (0, 0)),    # W2p (resident)
            pl.BlockSpec((1, c_pad), lambda i: (0, 0)),         # b2p (resident)
        ],
        out_specs=(pl.BlockSpec((tb, c_pad), lambda i: (i, 0)),   # padded logits
                   pl.BlockSpec((tb, 1), lambda i: (i, 0))),      # per-row CE loss
        compiler_params=pltpu.CompilerParams(
            dimension_semantics=("parallel",)),
    )(emb_p, amt_p, lbl_p, w1e_b, w1a, b1, w2p_b, b2p)

    logits = logits_p[:B, :C]
    loss = jnp.mean(loss_rows[:B, 0])
    return {"logits": logits, "loss": loss}


def _ref(emb, amount, label, w1e, w1a, b1, w2, b2, *, mean_amount, std_amount):
    # Reference with the same bf16-operand / f32-accumulate matmul contract.
    amt = (amount - mean_amount) / std_amount
    h = jnp.dot(emb.astype(jnp.bfloat16), w1e.astype(jnp.bfloat16),
                preferred_element_type=jnp.float32) + amt * w1a + b1
    h = jnp.maximum(h, 0.0)
    logits = jnp.dot(h.astype(jnp.bfloat16), w2.astype(jnp.bfloat16),
                     preferred_element_type=jnp.float32) + b2
    lse = jax.nn.logsumexp(logits, axis=-1)
    picked = jnp.take_along_axis(logits, label, axis=-1)[:, 0]
    return logits, jnp.mean(lse - picked)


if __name__ == "__main__":
    num_classes = 10
    mean_amount = 50.0
    std_amount = 25.0
    B = 32
    TB = 8   # small tile so the batch-tiled grid (grid=(4,)) is actually exercised

    key = jax.random.PRNGKey(0)
    k_emb, k_amt, k_lbl, k_w1, k_b1, k_w2, k_b2 = jax.random.split(key, 7)

    # "embedding model" output stand-in + raw amount + labels
    emb = jax.random.normal(k_emb, (B, EMB_DIM), dtype=jnp.float32)
    amount = jax.random.uniform(k_amt, (B, 1), minval=0.0, maxval=100.0,
                                dtype=jnp.float32)
    label = jax.random.randint(k_lbl, (B, 1), 0, num_classes, dtype=jnp.int32)

    # deterministic Linear params (PyTorch-style uniform +-1/sqrt(fan_in))
    bound1 = 1.0 / jnp.sqrt(EMB_DIM + 1.0)
    w1_full = jax.random.uniform(k_w1, (EMB_DIM + 1, HIDDEN),
                                 minval=-bound1, maxval=bound1,
                                 dtype=jnp.float32)
    w1e = w1_full[:EMB_DIM, :]                  # [768, 256]
    w1a = w1_full[EMB_DIM:, :]                  # [1, 256]
    b1 = jax.random.uniform(k_b1, (1, HIDDEN), minval=-bound1, maxval=bound1,
                            dtype=jnp.float32)
    bound2 = 1.0 / jnp.sqrt(float(HIDDEN))
    w2 = jax.random.uniform(k_w2, (HIDDEN, num_classes),
                            minval=-bound2, maxval=bound2, dtype=jnp.float32)
    b2 = jax.random.uniform(k_b2, (1, num_classes),
                            minval=-bound2, maxval=bound2, dtype=jnp.float32)

    out = mlp_classifier(emb, amount, label, w1e, w1a, b1, w2, b2,
                         mean_amount=mean_amount, std_amount=std_amount, tb=TB)
    logits = jax.block_until_ready(out["logits"])
    loss = jax.block_until_ready(out["loss"])

    ref_logits, ref_loss = _ref(emb, amount, label, w1e, w1a, b1, w2, b2,
                                mean_amount=mean_amount, std_amount=std_amount)
    assert logits.shape == (B, num_classes)
    assert jnp.allclose(logits, ref_logits, atol=1e-3, rtol=1e-3)
    assert jnp.allclose(loss, ref_loss, atol=1e-3, rtol=1e-3)
    print("KERNEL_OK")
</pallas_src>

<mosaic_0001>
module attributes {stable_mosaic.version = 11 : i64} {
  func.func @_mlp_ce_kernel(%arg0: i32, %arg1: memref<8x768xbf16, #tpu.memory_space<vmem>>, %arg2: memref<8x1xf32, #tpu.memory_space<vmem>>, %arg3: memref<8x1xi32, #tpu.memory_space<vmem>>, %arg4: memref<768x256xbf16, #tpu.memory_space<vmem>>, %arg5: memref<1x256xf32, #tpu.memory_space<vmem>>, %arg6: memref<1x256xf32, #tpu.memory_space<vmem>>, %arg7: memref<256x128xbf16, #tpu.memory_space<vmem>>, %arg8: memref<1x128xf32, #tpu.memory_space<vmem>>, %arg9: memref<8x128xf32, #tpu.memory_space<vmem>>, %arg10: memref<8x1xf32, #tpu.memory_space<vmem>>) attributes {dimension_semantics = [#tpu.dimension_semantics<parallel>], iteration_bounds = array<i64: 4>, scalar_prefetch = 0 : i64, scratch_operands = 0 : i64, tpu.core_type = #tpu.core_type<tc>, window_params = [{transform_indices = @transform_0, window_bounds = array<i64: 8, 768>}, {transform_indices = @transform_1, window_bounds = array<i64: 8, 1>}, {transform_indices = @transform_2, window_bounds = array<i64: 8, 1>}, {pipeline_mode = #tpu.pipeline_mode<synchronous>, transform_indices = @transform_3, window_bounds = array<i64: 768, 256>}, {pipeline_mode = #tpu.pipeline_mode<synchronous>, transform_indices = @transform_4, window_bounds = array<i64: 1, 256>}, {pipeline_mode = #tpu.pipeline_mode<synchronous>, transform_indices = @transform_5, window_bounds = array<i64: 1, 256>}, {pipeline_mode = #tpu.pipeline_mode<synchronous>, transform_indices = @transform_6, window_bounds = array<i64: 256, 128>}, {pipeline_mode = #tpu.pipeline_mode<synchronous>, transform_indices = @transform_7, window_bounds = array<i64: 1, 128>}, {transform_indices = @transform_8, window_bounds = array<i64: 8, 128>}, {transform_indices = @transform_9, window_bounds = array<i64: 8, 1>}]} {
    %c0 = arith.constant 0 : index
    %c0_0 = arith.constant 0 : index
    %0 = vector.load %arg2[%c0, %c0_0] : memref<8x1xf32, #tpu.memory_space<vmem>>, vector<8x1xf32>
    %cst = arith.constant 5.000000e+01 : f32
    %1 = vector.broadcast %cst : f32 to vector<8x1xf32>
    %2 = arith.subf %0, %1 : vector<8x1xf32>
    %cst_1 = arith.constant 4.000000e-02 : f32
    %3 = vector.broadcast %cst_1 : f32 to vector<8x1xf32>
    %4 = arith.mulf %2, %3 : vector<8x1xf32>
    %c0_2 = arith.constant 0 : index
    %c0_3 = arith.constant 0 : index
    %5 = vector.load %arg1[%c0_2, %c0_3] : memref<8x768xbf16, #tpu.memory_space<vmem>>, vector<8x768xbf16>
    %c0_4 = arith.constant 0 : index
    %c0_5 = arith.constant 0 : index
    %6 = vector.load %arg4[%c0_4, %c0_5] : memref<768x256xbf16, #tpu.memory_space<vmem>>, vector<768x256xbf16>
    %cst_6 = arith.constant dense<0.000000e+00> : vector<8x256xf32>
    %7 = tpu.matmul %5, %6, %cst_6 {dimension_numbers = #tpu.dot_dimension_numbers<[1], [0], [0], [1], [0, 0, 1, 1], [], []>} : vector<8x768xbf16>, vector<768x256xbf16>, vector<8x256xf32> -> vector<8x256xf32>
    %c0_7 = arith.constant 0 : index
    %c0_8 = arith.constant 0 : index
    %8 = vector.load %arg5[%c0_7, %c0_8] : memref<1x256xf32, #tpu.memory_space<vmem>>, vector<1x256xf32>
    %9 = vector.broadcast %4 : vector<8x1xf32> to vector<8x256xf32>
    %10 = vector.broadcast %8 : vector<1x256xf32> to vector<8x256xf32>
    %11 = arith.mulf %9, %10 : vector<8x256xf32>
    %12 = arith.addf %7, %11 : vector<8x256xf32>
    %c0_9 = arith.constant 0 : index
    %c0_10 = arith.constant 0 : index
    %13 = vector.load %arg6[%c0_9, %c0_10] : memref<1x256xf32, #tpu.memory_space<vmem>>, vector<1x256xf32>
    %14 = vector.broadcast %13 : vector<1x256xf32> to vector<8x256xf32>
    %15 = arith.addf %12, %14 : vector<8x256xf32>
    %cst_11 = arith.constant 0.000000e+00 : f32
    %16 = vector.broadcast %cst_11 : f32 to vector<8x256xf32>
    %17 = arith.maximumf %15, %16 : vector<8x256xf32>
    %18 = arith.truncf %17 : vector<8x256xf32> to vector<8x256xbf16>
    %c0_12 = arith.constant 0 : index
    %c0_13 = arith.constant 0 : index
    %19 = vector.load %arg7[%c0_12, %c0_13] : memref<256x128xbf16, #tpu.memory_space<vmem>>, vector<256x128xbf16>
    %cst_14 = arith.constant dense<0.000000e+00> : vector<8x128xf32>
    %20 = tpu.matmul %18, %19, %cst_14 {dimension_numbers = #tpu.dot_dimension_numbers<[1], [0], [0], [1], [0, 0, 1, 1], [], []>} : vector<8x256xbf16>, vector<256x128xbf16>, vector<8x128xf32> -> vector<8x128xf32>
    %c0_15 = arith.constant 0 : index
    %c0_16 = arith.constant 0 : index
    %21 = vector.load %arg8[%c0_15, %c0_16] : memref<1x128xf32, #tpu.memory_space<vmem>>, vector<1x128xf32>
    %22 = vector.broadcast %21 : vector<1x128xf32> to vector<8x128xf32>
    %23 = arith.addf %20, %22 : vector<8x128xf32>
    %c0_17 = arith.constant 0 : index
    %c0_18 = arith.constant 0 : index
    %24 = vector.load %arg9[%c0_17, %c0_18] : memref<8x128xf32, #tpu.memory_space<vmem>>, vector<8x128xf32>
    tpu.vector_store %arg9[%c0_17, %c0_18], %23 {strides = array<i32>} : memref<8x128xf32, #tpu.memory_space<vmem>>, vector<8x128xf32>,
    %cst_19 = arith.constant dense<0xFF800000> : vector<8xf32>
    %25 = vector.multi_reduction <maximumf>, %23, %cst_19 [1] : vector<8x128xf32> to vector<8xf32>
    %26 = vector.shape_cast %25 : vector<8xf32> to vector<8x1xf32>
    %27 = vector.broadcast %26 : vector<8x1xf32> to vector<8x128xf32>
    %28 = arith.subf %23, %27 : vector<8x128xf32>
    %29 = math.exp %28 : vector<8x128xf32>
    %cst_20 = arith.constant dense<0.000000e+00> : vector<8xf32>
    %30 = vector.multi_reduction <add>, %29, %cst_20 [1] : vector<8x128xf32> to vector<8xf32>
    %31 = vector.shape_cast %30 : vector<8xf32> to vector<8x1xf32>
    %32 = math.log %31 : vector<8x1xf32>
    %33 = arith.addf %32, %26 : vector<8x1xf32>
    %34 = tpu.iota {dimensions = array<i32: 1>} : vector<8x128xi32>
    %c0_21 = arith.constant 0 : index
    %c0_22 = arith.constant 0 : index
    %35 = vector.load %arg3[%c0_21, %c0_22] : memref<8x1xi32, #tpu.memory_space<vmem>>, vector<8x1xi32>
    %36 = vector.broadcast %35 : vector<8x1xi32> to vector<8x128xi32>
    %37 = arith.cmpi eq, %34, %36 : vector<8x128xi32>
    %cst_23 = arith.constant 0.000000e+00 : f32
    %38 = vector.broadcast %cst_23 : f32 to vector<8x128xf32>
    %39 = arith.select %37, %23, %38 : vector<8x128xi1>, vector<8x128xf32>
    %cst_24 = arith.constant dense<0.000000e+00> : vector<8xf32>
    %40 = vector.multi_reduction <add>, %39, %cst_24 [1] : vector<8x128xf32> to vector<8xf32>
    %41 = vector.shape_cast %40 : vector<8xf32> to vector<8x1xf32>
    %42 = arith.subf %33, %41 : vector<8x1xf32>
    %c0_25 = arith.constant 0 : index
    %c0_26 = arith.constant 0 : index
    %43 = vector.load %arg10[%c0_25, %c0_26] : memref<8x1xf32, #tpu.memory_space<vmem>>, vector<8x1xf32>
    tpu.vector_store %arg10[%c0_25, %c0_26], %42 {strides = array<i32>} : memref<8x1xf32, #tpu.memory_space<vmem>>, vector<8x1xf32>,
    return
  }
  func.func @transform_0(%arg0: i32) -> (i32, i32) {
    %c0_i32 = arith.constant 0 : i32
    %c0_i32_0 = arith.constant 0 : i32
    return %arg0, %c0_i32 : i32, i32
  }
  func.func @transform_1(%arg0: i32) -> (i32, i32) {
    %c0_i32 = arith.constant 0 : i32
    %c0_i32_0 = arith.constant 0 : i32
    return %arg0, %c0_i32 : i32, i32
  }
  func.func @transform_2(%arg0: i32) -> (i32, i32) {
    %c0_i32 = arith.constant 0 : i32
    %c0_i32_0 = arith.constant 0 : i32
    return %arg0, %c0_i32 : i32, i32
  }
  func.func @transform_3(%arg0: i32) -> (i32, i32) {
    %c0_i32 = arith.constant 0 : i32
    %c0_i32_0 = arith.constant 0 : i32
    %c0_i32_1 = arith.constant 0 : i32
    return %c0_i32, %c0_i32_0 : i32, i32
  }
  func.func @transform_4(%arg0: i32) -> (i32, i32) {
    %c0_i32 = arith.constant 0 : i32
    %c0_i32_0 = arith.constant 0 : i32
    %c0_i32_1 = arith.constant 0 : i32
    return %c0_i32, %c0_i32_0 : i32, i32
  }
  func.func @transform_5(%arg0: i32) -> (i32, i32) {
    %c0_i32 = arith.constant 0 : i32
    %c0_i32_0 = arith.constant 0 : i32
    %c0_i32_1 = arith.constant 0 : i32
    return %c0_i32, %c0_i32_0 : i32, i32
  }
  func.func @transform_6(%arg0: i32) -> (i32, i32) {
    %c0_i32 = arith.constant 0 : i32
    %c0_i32_0 = arith.constant 0 : i32
    %c0_i32_1 = arith.constant 0 : i32
    return %c0_i32, %c0_i32_0 : i32, i32
  }
  func.func @transform_7(%arg0: i32) -> (i32, i32) {
    %c0_i32 = arith.constant 0 : i32
    %c0_i32_0 = arith.constant 0 : i32
    %c0_i32_1 = arith.constant 0 : i32
    return %c0_i32, %c0_i32_0 : i32, i32
  }
  func.func @transform_8(%arg0: i32) -> (i32, i32) {
    %c0_i32 = arith.constant 0 : i32
    %c0_i32_0 = arith.constant 0 : i32
    return %arg0, %c0_i32 : i32, i32
  }
  func.func @transform_9(%arg0: i32) -> (i32, i32) {
    %c0_i32 = arith.constant 0 : i32
    %c0_i32_0 = arith.constant 0 : i32
    return %arg0, %c0_i32 : i32, i32
  }
}

</mosaic_0001>

<llo_original>
// kernel: tpu_custom_call.1
$region0: #{tpu_custom_call.1}
  #allocation0 [shape = 'u32[]', space=smem, size = 0x4, offset = 0x4, fixed_abs, tag = 'smem constant byte address 0x4 - core index']
  #allocation1 [shape = 'u32[144,128]{1,0:T(1,128)}', space=vmem, size = 0x12000, scoped, tag = 'internal scratch']
  %s0 = inlined_call_operand.hbm [shape: bf16[32,768], index: 0, kind: input, shape index: {}]
  %s1 = inlined_call_operand.vmem [shape: f32[32,1], index: 1, kind: input, shape index: {}]
  %s2 = inlined_call_operand.vmem [shape: s32[32,1], index: 2, kind: input, shape index: {}]
  %s3 = inlined_call_operand.hbm [shape: bf16[768,256], index: 3, kind: input, shape index: {}]
  %s4 = inlined_call_operand.vmem [shape: f32[1,256], index: 4, kind: input, shape index: {}]
  %s5 = inlined_call_operand.vmem [shape: f32[1,256], index: 5, kind: input, shape index: {}]
  %s6 = inlined_call_operand.hbm [shape: bf16[256,128], index: 6, kind: input, shape index: {}]
  %s7 = inlined_call_operand.vmem [shape: f32[1,128], index: 7, kind: input, shape index: {}]
  %s8 = inlined_call_operand.hbm [shape: f32[32,128], index: 8, kind: output, shape index: {0}]
  %s9 = inlined_call_operand.vmem [shape: f32[32,1], index: 9, kind: output, shape index: {1}]
  %10 = xla_tuple %s8, %s9
  %s11 = sld [smem:[#allocation0]]
  $region85: #{tpu_custom_call.1} parent=0
    _
  %s13 = ssub.s32 1, %s11
  %s14 = scalar_select 0, %s13, %s11
  $region1: #{tpu_custom_call.1} parent=0
    #allocation2 [shape = 'u8[24576]{0}', space=vmem, size = 0x6000, scoped, tag = 'input window, operand 0']
    #allocation3 [shape = 's32[2]{0}', space=sflag, size = 0x8, scoped, tag = 'scoped memory for tpu_custom_call.1']
    #allocation4 [shape = 's32[2]{0}', space=sflag, size = 0x8, scoped, tag = 'scoped memory for tpu_custom_call.1']
    #allocation5 [shape = 'u8[393216]{0}', space=vmem, size = 0x60000, scoped, tag = 'input window, operand 3, single buffered']
    #allocation6 [shape = 's32[1]{0}', space=sflag, size = 0x4, scoped, tag = 'scoped memory for tpu_custom_call.1']
    #allocation7 [shape = 'u8[65536]{0}', space=vmem, size = 0x10000, scoped, tag = 'input window, operand 6, single buffered']
    #allocation8 [shape = 'u8[8192]{0}', space=vmem, size = 0x2000, scoped, tag = 'output window, operand 0']
    %15 = vsyncpa [#allocation3], 0
    %s16 = scalar_lea.sflag [#allocation3], 1
    %17 = vsyncpa %s16, 0
    %18 = vsyncpa [#allocation6], 0
    %19 = vsyncpa [#allocation4], 0
    %s20 = scalar_lea.sflag [#allocation4], 1
    %21 = vsyncpa %s20, 0
    loop: start=0, step=1, limit=6
    $region2: #{tpu_custom_call.1} parent=1 // loop_pre_header
      _
    $region3: #{tpu_custom_call.1} parent=1 // loop_header
      %s23 = sphi 0, %s27
      %p24 = scmp.ge.s32.totalorder %s23, 6
      %s33 = sphi 0, %s35
      %s36 = sphi 0, %s33
      %s37 = sphi 0, %s36
      %s53 = sphi 0, %s37
      %s59 = sphi 0, %s61
      %s62 = sphi 0, %s59
      %s63 = sphi 0, %s62
      %s79 = sphi 0, %s63
      %s85 = sphi 0, %s87
      %s88 = sphi 0, %s85
      %s89 = sphi 0, %s88
      %s105 = sphi 0, %s89
      %s109 = sphi 0, %s109
      %s111 = sphi 0, %s109
      %s112 = sphi 0, %s111
      %s126 = sphi 0, %s112
      %s130 = sphi 0, %s130
      %s132 = sphi 0, %s130
      %s133 = sphi 0, %s132
      %s147 = sphi 0, %s133
      %s151 = sphi 0, %s151
      %s153 = sphi 0, %s151
      %s154 = sphi 0, %s153
      %s168 = sphi 0, %s154
      %s172 = sphi 0, %s172
      %s174 = sphi 0, %s172
      %s175 = sphi 0, %s174
      %s189 = sphi 0, %s175
      %s193 = sphi 0, %s193
      %s195 = sphi 0, %s193
      %s196 = sphi 0, %s195
      %s210 = sphi 0, %s196
      %s216 = sphi 0, %s218
      %s219 = sphi 0, %s216
      %s220 = sphi 0, %s219
      %s236 = sphi 0, %s220
      %s242 = sphi 0, %s244
      %s245 = sphi 0, %s242
      %s246 = sphi 0, %s245
      %s262 = sphi 0, %s246
    $region4: #{tpu_custom_call.1} parent=1 // loop_header_branch
      %26 = sbr.rel (%p24) target = $region8
    $region5: #{tpu_custom_call.1} parent=1 // loop_body
      %s28 = ssub.s32 %s23, 1
      %s29 = ssub.s32 %s23, 2
      %s30 = sadd.s32 %s23, 1
      %s31 = ssub.s32 %s23, %s30
      %p32 = scmp.eq.s32.totalorder %s31, 0
      %s34 = sadd.s32 %s33, 1
      %s35 = scalar_select %p32, %s33, %s34
      %p38 = pneg %p32
      %p39 = scmp.eq.s32.totalorder %s23, 3
      %p40 = por %p38, %p39
      %p41 = scmp.ne.s32.totalorder %s33, %s36
      %p42 = scmp.eq.s32.totalorder %s23, 0
      %p43 = por %p41, %p42
      %p44 = scmp.ne.s32.totalorder %s33, %s36
      %p45 = scmp.eq.s32.totalorder %s28, 3
      %p46 = por %p44, %p45
      %p47 = scmp.ne.s32.totalorder %s36, %s37
      %p48 = scmp.eq.s32.totalorder %s28, 0
      %p49 = por %p47, %p48
      %p50 = scmp.ne.s32.totalorder %s36, %s37
      %p51 = scmp.eq.s32.totalorder %s29, 3
      %p52 = por %p50, %p51
      %p54 = scmp.ne.s32.totalorder %s37, %s53
      %p55 = scmp.eq.s32.totalorder %s29, 0
      %p56 = por %p54, %p55
      %s57 = ssub.s32 %s23, %s30
      %p58 = scmp.eq.s32.totalorder %s57, 0
      %s60 = sadd.s32 %s59, 1
      %s61 = scalar_select %p58, %s59, %s60
      %p64 = pneg %p58
      %p65 = scmp.eq.s32.totalorder %s23, 3
      %p66 = por %p64, %p65
      %p67 = scmp.ne.s32.totalorder %s59, %s62
      %p68 = scmp.eq.s32.totalorder %s23, 0
      %p69 = por %p67, %p68
      %p70 = scmp.ne.s32.totalorder %s59, %s62
      %p71 = scmp.eq.s32.totalorder %s28, 3
      %p72 = por %p70, %p71
      %p73 = scmp.ne.s32.totalorder %s62, %s63
      %p74 = scmp.eq.s32.totalorder %s28, 0
      %p75 = por %p73, %p74
      %p76 = scmp.ne.s32.totalorder %s62, %s63
      %p77 = scmp.eq.s32.totalorder %s29, 3
      %p78 = por %p76, %p77
      %p80 = scmp.ne.s32.totalorder %s63, %s79
      %p81 = scmp.eq.s32.totalorder %s29, 0
      %p82 = por %p80, %p81
      %s83 = ssub.s32 %s23, %s30
      %p84 = scmp.eq.s32.totalorder %s83, 0
      %s86 = sadd.s32 %s85, 1
      %s87 = scalar_select %p84, %s85, %s86
      %p90 = pneg %p84
      %p91 = scmp.eq.s32.totalorder %s23, 3
      %p92 = por %p90, %p91
      %p93 = scmp.ne.s32.totalorder %s85, %s88
      %p94 = scmp.eq.s32.totalorder %s23, 0
      %p95 = por %p93, %p94
      %p96 = scmp.ne.s32.totalorder %s85, %s88
      %p97 = scmp.eq.s32.totalorder %s28, 3
      %p98 = por %p96, %p97
      %p99 = scmp.ne.s32.totalorder %s88, %s89
      %p100 = scmp.eq.s32.totalorder %s28, 0
      %p101 = por %p99, %p100
      %p102 = scmp.ne.s32.totalorder %s88, %s89
      %p103 = scmp.eq.s32.totalorder %s29, 3
      %p104 = por %p102, %p103
      %p106 = scmp.ne.s32.totalorder %s89, %s105
      %p107 = scmp.eq.s32.totalorder %s29, 0
      %p108 = por %p106, %p107
      %s110 = sadd.s32 %s109, 1
      %p113 = scmp.eq.s32.totalorder %s23, 3
      %p114 = scmp.ne.s32.totalorder %s109, %s111
      %p115 = scmp.eq.s32.totalorder %s23, 0
      %p116 = por %p114, %p115
      %p117 = scmp.ne.s32.totalorder %s109, %s111
      %p118 = scmp.eq.s32.totalorder %s28, 3
      %p119 = por %p117, %p118
      %p120 = scmp.ne.s32.totalorder %s111, %s112
      %p121 = scmp.eq.s32.totalorder %s28, 0
      %p122 = por %p120, %p121
      %p123 = scmp.ne.s32.totalorder %s111, %s112
      %p124 = scmp.eq.s32.totalorder %s29, 3
      %p125 = por %p123, %p124
      %p127 = scmp.ne.s32.totalorder %s112, %s126
      %p128 = scmp.eq.s32.totalorder %s29, 0
      %p129 = por %p127, %p128
      %s131 = sadd.s32 %s130, 1
      %p134 = scmp.eq.s32.totalorder %s23, 3
      %p135 = scmp.ne.s32.totalorder %s130, %s132
      %p136 = scmp.eq.s32.totalorder %s23, 0
      %p137 = por %p135, %p136
      %p138 = scmp.ne.s32.totalorder %s130, %s132
      %p139 = scmp.eq.s32.totalorder %s28, 3
      %p140 = por %p138, %p139
      %p141 = scmp.ne.s32.totalorder %s132, %s133
      %p142 = scmp.eq.s32.totalorder %s28, 0
      %p143 = por %p141, %p142
      %p144 = scmp.ne.s32.totalorder %s132, %s133
      %p145 = scmp.eq.s32.totalorder %s29, 3
      %p146 = por %p144, %p145
      %p148 = scmp.ne.s32.totalorder %s133, %s147
      %p149 = scmp.eq.s32.totalorder %s29, 0
      %p150 = por %p148, %p149
      %s152 = sadd.s32 %s151, 1
      %p155 = scmp.eq.s32.totalorder %s23, 3
      %p156 = scmp.ne.s32.totalorder %s151, %s153
      %p157 = scmp.eq.s32.totalorder %s23, 0
      %p158 = por %p156, %p157
      %p159 = scmp.ne.s32.totalorder %s151, %s153
      %p160 = scmp.eq.s32.totalorder %s28, 3
      %p161 = por %p159, %p160
      %p162 = scmp.ne.s32.totalorder %s153, %s154
      %p163 = scmp.eq.s32.totalorder %s28, 0
      %p164 = por %p162, %p163
      %p165 = scmp.ne.s32.totalorder %s153, %s154
      %p166 = scmp.eq.s32.totalorder %s29, 3
      %p167 = por %p165, %p166
      %p169 = scmp.ne.s32.totalorder %s154, %s168
      %p170 = scmp.eq.s32.totalorder %s29, 0
      %p171 = por %p169, %p170
      %s173 = sadd.s32 %s172, 1
      %p176 = scmp.eq.s32.totalorder %s23, 3
      %p177 = scmp.ne.s32.totalorder %s172, %s174
      %p178 = scmp.eq.s32.totalorder %s23, 0
      %p179 = por %p177, %p178
      %p180 = scmp.ne.s32.totalorder %s172, %s174
      %p181 = scmp.eq.s32.totalorder %s28, 3
      %p182 = por %p180, %p181
      %p183 = scmp.ne.s32.totalorder %s174, %s175
      %p184 = scmp.eq.s32.totalorder %s28, 0
      %p185 = por %p183, %p184
      %p186 = scmp.ne.s32.totalorder %s174, %s175
      %p187 = scmp.eq.s32.totalorder %s29, 3
      %p188 = por %p186, %p187
      %p190 = scmp.ne.s32.totalorder %s175, %s189
      %p191 = scmp.eq.s32.totalorder %s29, 0
      %p192 = por %p190, %p191
      %s194 = sadd.s32 %s193, 1
      %p197 = scmp.eq.s32.totalorder %s23, 3
      %p198 = scmp.ne.s32.totalorder %s193, %s195
      %p199 = scmp.eq.s32.totalorder %s23, 0
      %p200 = por %p198, %p199
      %p201 = scmp.ne.s32.totalorder %s193, %s195
      %p202 = scmp.eq.s32.totalorder %s28, 3
      %p203 = por %p201, %p202
      %p204 = scmp.ne.s32.totalorder %s195, %s196
      %p205 = scmp.eq.s32.totalorder %s28, 0
      %p206 = por %p204, %p205
      %p207 = scmp.ne.s32.totalorder %s195, %s196
      %p208 = scmp.eq.s32.totalorder %s29, 3
      %p209 = por %p207, %p208
      %p211 = scmp.ne.s32.totalorder %s196, %s210
      %p212 = scmp.eq.s32.totalorder %s29, 0
      %p213 = por %p211, %p212
      %s214 = ssub.s32 %s23, %s30
      %p215 = scmp.eq.s32.totalorder %s214, 0
      %s217 = sadd.s32 %s216, 1
      %s218 = scalar_select %p215, %s216, %s217
      %p221 = pneg %p215
      %p222 = scmp.eq.s32.totalorder %s23, 3
      %p223 = por %p221, %p222
      %p224 = scmp.ne.s32.totalorder %s216, %s219
      %p225 = scmp.eq.s32.totalorder %s23, 0
      %p226 = por %p224, %p225
      %p227 = scmp.ne.s32.totalorder %s216, %s219
      %p228 = scmp.eq.s32.totalorder %s28, 3
      %p229 = por %p227, %p228
      %p230 = scmp.ne.s32.totalorder %s219, %s220
      %p231 = scmp.eq.s32.totalorder %s28, 0
      %p232 = por %p230, %p231
      %p233 = scmp.ne.s32.totalorder %s219, %s220
      %p234 = scmp.eq.s32.totalorder %s29, 3
      %p235 = por %p233, %p234
      %p237 = scmp.ne.s32.totalorder %s220, %s236
      %p238 = scmp.eq.s32.totalorder %s29, 0
      %p239 = por %p237, %p238
      %s240 = ssub.s32 %s23, %s30
      %p241 = scmp.eq.s32.totalorder %s240, 0
      %s243 = sadd.s32 %s242, 1
      %s244 = scalar_select %p241, %s242, %s243
      %p247 = pneg %p241
      %p248 = scmp.eq.s32.totalorder %s23, 3
      %p249 = por %p247, %p248
      %p250 = scmp.ne.s32.totalorder %s242, %s245
      %p251 = scmp.eq.s32.totalorder %s23, 0
      %p252 = por %p250, %p251
      %p253 = scmp.ne.s32.totalorder %s242, %s245
      %p254 = scmp.eq.s32.totalorder %s28, 3
      %p255 = por %p253, %p254
      %p256 = scmp.ne.s32.totalorder %s245, %s246
      %p257 = scmp.eq.s32.totalorder %s28, 0
      %p258 = por %p256, %p257
      %p259 = scmp.ne.s32.totalorder %s245, %s246
      %p260 = scmp.eq.s32.totalorder %s29, 3
      %p261 = por %p259, %p260
      %p263 = scmp.ne.s32.totalorder %s246, %s262
      %p264 = scmp.eq.s32.totalorder %s29, 0
      %p265 = por %p263, %p264
      %p266 = scmp.le.s32.totalorder 1, %s23
      %p267 = scmp.lt.s32.totalorder %s23, 5
      %p268 = pnand %p266, %p267
      %p269 = pneg %p268
      // Predicated region
      $region9: #{tpu_custom_call.1} parent=5 // pred_check
        _
      $region10: #{tpu_custom_call.1} parent=5 // pred_check_branch
        %271 = sbr.rel (%p268) target = $region12
      $region11: #{tpu_custom_call.1} parent=5 // pred_region
        %s272 = ssub.s32 %s23, 1
        // Predicated region
        $region13: #{tpu_custom_call.1} parent=11 // pred_check
          %p273 = pneg %p122
        $region14: #{tpu_custom_call.1} parent=11 // pred_check_branch
          %275 = sbr.rel (%p273) target = $region16
        $region15: #{tpu_custom_call.1} parent=11 // pred_region
          %s277 = ssub.s32 12288, 12288
          %278 = vsyncadd [#allocation6], %s277
          %s279 = sshll.u32 [#allocation5], 4
          %s280 = int_to_ptr.vmem [resolvable:$true] %s279
          %285 = dma.hbm_to_vmem [thread:$0]  %s3, 12288, %s280, [#allocation6], 128, 128, 8
        $region16: #{tpu_custom_call.1} parent=11 // pred_fallthru
          _
        // Predicated region
        $region17: #{tpu_custom_call.1} parent=11 // pred_check
          %p286 = pneg %p143
        $region18: #{tpu_custom_call.1} parent=11 // pred_check_branch
          %288 = sbr.rel (%p286) target = $region20
        $region19: #{tpu_custom_call.1} parent=11 // pred_region
          _
        $region20: #{tpu_custom_call.1} parent=11 // pred_fallthru
          _
        // Predicated region
        $region21: #{tpu_custom_call.1} parent=11 // pred_check
          %p289 = pneg %p164
        $region22: #{tpu_custom_call.1} parent=11 // pred_check_branch
          %291 = sbr.rel (%p289) target = $region24
        $region23: #{tpu_custom_call.1} parent=11 // pred_region
          _
        $region24: #{tpu_custom_call.1} parent=11 // pred_fallthru
          _
        // Predicated region
        $region25: #{tpu_custom_call.1} parent=11 // pred_check
          %p292 = pneg %p185
        $region26: #{tpu_custom_call.1} parent=11 // pred_check_branch
          %294 = sbr.rel (%p292) target = $region28
        $region27: #{tpu_custom_call.1} parent=11 // pred_region
          %s296 = ssub.s32 2048, 2048
          %297 = vsyncadd [#allocation6], %s296
          %s298 = sshll.u32 [#allocation7], 4
          %s299 = int_to_ptr.vmem [resolvable:$true] %s298
          %304 = dma.hbm_to_vmem [thread:$0]  %s6, 2048, %s299, [#allocation6], 64, 64, 4
        $region28: #{tpu_custom_call.1} parent=11 // pred_fallthru
          _
        // Predicated region
        $region29: #{tpu_custom_call.1} parent=11 // pred_check
          %p305 = pneg %p206
        $region30: #{tpu_custom_call.1} parent=11 // pred_check_branch
          %307 = sbr.rel (%p305) target = $region32
        $region31: #{tpu_custom_call.1} parent=11 // pred_region
          _
        $region32: #{tpu_custom_call.1} parent=11 // pred_fallthru
          _
      $region12: #{tpu_custom_call.1} parent=5 // pred_fallthru
        _
      %p308 = scmp.lt.s32.totalorder %s23, 4
      // Predicated region
      $region33: #{tpu_custom_call.1} parent=5 // pred_check
        %p309 = pneg %p308
      $region34: #{tpu_custom_call.1} parent=5 // pred_check_branch
        %311 = sbr.rel (%p309) target = $region36
      $region35: #{tpu_custom_call.1} parent=5 // pred_region
        // Predicated region
        $region37: #{tpu_custom_call.1} parent=35 // pred_check
          %p312 = pneg %p43
        $region38: #{tpu_custom_call.1} parent=35 // pred_check_branch
          %314 = sbr.rel (%p312) target = $region40
        $region39: #{tpu_custom_call.1} parent=35 // pred_region
          %s315 = sand.u32 %s33, 1
          %s316 = scalar_lea.sflag [#allocation3], %s315
          %s317 = sand.u32 %s33, 1
          %s318 = smul.addr %s317, 24
          %s319 = scalar_lea.vmem [#allocation2], %s318
          %s321 = ssub.s32 384, 384
          %322 = vsyncadd %s316, %s321
          %s323 = smul.addr %s23, 6
          %s324 = smul.addr %s323, 64
          %s325 = scalar_lea.hbm %s0, %s324
          %s327 = sshll.u32 %s319, 4
          %s328 = int_to_ptr.vmem [resolvable:$true] %s327
          %330 = dma.hbm_to_vmem [thread:$0]  %s325, 384, %s328, %s316
        $region40: #{tpu_custom_call.1} parent=35 // pred_fallthru
          _
        // Predicated region
        $region41: #{tpu_custom_call.1} parent=35 // pred_check
          %p331 = pneg %p69
        $region42: #{tpu_custom_call.1} parent=35 // pred_check_branch
          %333 = sbr.rel (%p331) target = $region44
        $region43: #{tpu_custom_call.1} parent=35 // pred_region
          %p334 = scmp.lt.s32.totalorder %s23, 3
          %s335 = scalar_select %p334, %s23, 3
          %s336 = smul.addr %s335, 8
          %s337 = scalar_lea.vmem %s1, %s336
        $region44: #{tpu_custom_call.1} parent=35 // pred_fallthru
          _
        // Predicated region
        $region45: #{tpu_custom_call.1} parent=35 // pred_check
          %p338 = pneg %p95
        $region46: #{tpu_custom_call.1} parent=35 // pred_check_branch
          %340 = sbr.rel (%p338) target = $region48
        $region47: #{tpu_custom_call.1} parent=35 // pred_region
          %p341 = scmp.lt.s32.totalorder %s23, 3
          %s342 = scalar_select %p341, %s23, 3
          %s343 = smul.addr %s342, 8
          %s344 = scalar_lea.vmem %s2, %s343
        $region48: #{tpu_custom_call.1} parent=35 // pred_fallthru
          _
      $region36: #{tpu_custom_call.1} parent=5 // pred_fallthru
        _
      %p345 = scmp.le.s32.totalorder 1, %s23
      %p346 = scmp.lt.s32.totalorder %s23, 5
      %p347 = pnand %p345, %p346
      %p348 = pneg %p347
      // Predicated region
      $region49: #{tpu_custom_call.1} parent=5 // pred_check
        _
      $region50: #{tpu_custom_call.1} parent=5 // pred_check_branch
        %350 = sbr.rel (%p347) target = $region52
      $region51: #{tpu_custom_call.1} parent=5 // pred_region
        %s351 = ssub.s32 %s23, 1
        %s352 = sand.u32 %s36, 1
        %s353 = scalar_lea.sflag [#allocation3], %s352
        %s354 = sand.u32 %s36, 1
        %s355 = smul.addr %s354, 24
        %s356 = scalar_lea.vmem [#allocation2], %s355
        // Predicated region
        $region53: #{tpu_custom_call.1} parent=51 // pred_check
          %p357 = pneg %p49
        $region54: #{tpu_custom_call.1} parent=51 // pred_check_branch
          %359 = sbr.rel (%p357) target = $region56
        $region55: #{tpu_custom_call.1} parent=51 // pred_region
          %360 = dma.done %s353, 384
        $region56: #{tpu_custom_call.1} parent=51 // pred_fallthru
          _
        // Predicated region
        $region57: #{tpu_custom_call.1} parent=51 // pred_check
          %p361 = pneg %p122
        $region58: #{tpu_custom_call.1} parent=51 // pred_check_branch
          %363 = sbr.rel (%p361) target = $region60
        $region59: #{tpu_custom_call.1} parent=51 // pred_region
          %364 = dma.done [#allocation6], 12288
        $region60: #{tpu_custom_call.1} parent=51 // pred_fallthru
          _
        // Predicated region
        $region61: #{tpu_custom_call.1} parent=51 // pred_check
          %p365 = pneg %p185
        $region62: #{tpu_custom_call.1} parent=51 // pred_check_branch
          %367 = sbr.rel (%p365) target = $region64
        $region63: #{tpu_custom_call.1} parent=51 // pred_region
          %368 = dma.done [#allocation6], 2048
        $region64: #{tpu_custom_call.1} parent=51 // pred_fallthru
          _
        %s369 = sand.u32 %s36, 1
        %s370 = scalar_lea.sflag [#allocation3], %s369
        %s371 = sand.u32 %s36, 1
        %s372 = smul.addr %s371, 24
        %s373 = scalar_lea.vmem [#allocation2], %s372
        %p374 = pneg %p49
        %p375 = pneg %p46
        %p376 = scmp.lt.s32.totalorder %s28, 3
        %s377 = scalar_select %p376, %s28, 3
        %s378 = smul.addr %s377, 8
        %s379 = scalar_lea.vmem %s1, %s378
        %p380 = pneg %p75
        %p381 = pneg %p72
        %p382 = scmp.lt.s32.totalorder %s28, 3
        %s383 = scalar_select %p382, %s28, 3
        %s384 = smul.addr %s383, 8
        %s385 = scalar_lea.vmem %s2, %s384
        %p386 = pneg %p101
        %p387 = pneg %p98
        %p388 = pneg %p122
        %p389 = pneg %p119
        %p390 = pneg %p143
        %p391 = pneg %p140
        %p392 = pneg %p164
        %p393 = pneg %p161
        %p394 = pneg %p185
        %p395 = pneg %p182
        %p396 = pneg %p206
        %p397 = pneg %p203
        %p398 = pneg %p232
        %p399 = pneg %p229
        %s400 = sand.u32 %s219, 1
        %s401 = scalar_lea.sflag [#allocation4], %s400
        %s402 = sand.u32 %s219, 1
        %s403 = smul.addr %s402, 8
        %s404 = scalar_lea.vmem [#allocation8], %s403
        %p405 = pneg %p258
        %p406 = pneg %p255
        %p407 = scmp.lt.s32.totalorder %s28, 3
        %s408 = scalar_select %p407, %s28, 3
        %s409 = smul.addr %s408, 8
        %s410 = scalar_lea.vmem %s9, %s409
        %p411 = scmp.lt.s32.totalorder %s28, 3
        %s412 = scalar_select %p411, %s28, 3
        %s413 = smul.addr %s412, 8
        %s414 = scalar_lea.vmem %s1, %s413
        %p415 = scmp.lt.s32.totalorder %s28, 3
        %s416 = scalar_select %p415, %s28, 3
        %s417 = smul.addr %s416, 8
        %s418 = scalar_lea.vmem %s2, %s417
        %p419 = scmp.lt.s32.totalorder %s28, 3
        %s420 = scalar_select %p419, %s28, 3
        %s421 = smul.addr %s420, 8
        %s422 = scalar_lea.vmem %s9, %s421
        %v424 = vld [vmem:[%s414] sm:$0xff]
        %v425 = vsub.f32 %v424, 50.0
        %v426 = vmul.f32 %v425, 0.04
        %v427 = vld [vmem:[%s356] sm:$0xff]
        %v428 = vld [vmem:[%s356 + $0x8] sm:$0xff]
        %v429 = vld [vmem:[%s356 + $0x10] sm:$0xff]
        %v430 = vld [vmem:[#allocation5] sm:$0xff]
        %v431 = vld [vmem:[#allocation5 + $0x8] sm:$0xff]
        %v432 = vld [vmem:[#allocation5 + $0x10] sm:$0xff]
        %v433 = vld [vmem:[#allocation5 + $0x18] sm:$0xff]
        %v434 = vld [vmem:[#allocation5 + $0x20] sm:$0xff]
        %v435 = vld [vmem:[#allocation5 + $0x28] sm:$0xff]
        %v436 = vld [vmem:[#allocation5 + $0x30] sm:$0xff]
        %v437 = vld [vmem:[#allocation5 + $0x38] sm:$0xff]
        %v438 = vld [vmem:[#allocation5 + $0x40] sm:$0xff]
        %v439 = vld [vmem:[#allocation5 + $0x48] sm:$0xff]
        %v440 = vld [vmem:[#allocation5 + $0x50] sm:$0xff]
        %v441 = vld [vmem:[#allocation5 + $0x58] sm:$0xff]
        %v442 = vld [vmem:[#allocation5 + $0x60] sm:$0xff]
        %v443 = vld [vmem:[#allocation5 + $0x68] sm:$0xff]
        %v444 = vld [vmem:[#allocation5 + $0x70] sm:$0xff]
        %v445 = vld [vmem:[#allocation5 + $0x78] sm:$0xff]
        %v446 = vld [vmem:[#allocation5 + $0x80] sm:$0xff]
        %v447 = vld [vmem:[#allocation5 + $0x88] sm:$0xff]
        %v448 = vld [vmem:[#allocation5 + $0x90] sm:$0xff]
        %v449 = vld [vmem:[#allocation5 + $0x98] sm:$0xff]
        %v450 = vld [vmem:[#allocation5 + $0xa0] sm:$0xff]
        %v451 = vld [vmem:[#allocation5 + $0xa8] sm:$0xff]
        %v452 = vld [vmem:[#allocation5 + $0xb0] sm:$0xff]
        %v453 = vld [vmem:[#allocation5 + $0xb8] sm:$0xff]
        %v454 = vld [vmem:[#allocation5 + $0xc0] sm:$0xff]
        %v455 = vld [vmem:[#allocation5 + $0xc8] sm:$0xff]
        %v456 = vld [vmem:[#allocation5 + $0xd0] sm:$0xff]
        %v457 = vld [vmem:[#allocation5 + $0xd8] sm:$0xff]
        %v458 = vld [vmem:[#allocation5 + $0xe0] sm:$0xff]
        %v459 = vld [vmem:[#allocation5 + $0xe8] sm:$0xff]
        %v460 = vld [vmem:[#allocation5 + $0xf0] sm:$0xff]
        %v461 = vld [vmem:[#allocation5 + $0xf8] sm:$0xff]
        %v462 = vld [vmem:[#allocation5 + $0x100] sm:$0xff]
        %v463 = vld [vmem:[#allocation5 + $0x108] sm:$0xff]
        %v464 = vld [vmem:[#allocation5 + $0x110] sm:$0xff]
        %v465 = vld [vmem:[#allocation5 + $0x118] sm:$0xff]
        %v466 = vld [vmem:[#allocation5 + $0x120] sm:$0xff]
        %v467 = vld [vmem:[#allocation5 + $0x128] sm:$0xff]
        %v468 = vld [vmem:[#allocation5 + $0x130] sm:$0xff]
        %v469 = vld [vmem:[#allocation5 + $0x138] sm:$0xff]
        %v470 = vld [vmem:[#allocation5 + $0x140] sm:$0xff]
        %v471 = vld [vmem:[#allocation5 + $0x148] sm:$0xff]
        %v472 = vld [vmem:[#allocation5 + $0x150] sm:$0xff]
        %v473 = vld [vmem:[#allocation5 + $0x158] sm:$0xff]
        %v474 = vld [vmem:[#allocation5 + $0x160] sm:$0xff]
        %v475 = vld [vmem:[#allocation5 + $0x168] sm:$0xff]
        %v476 = vld [vmem:[#allocation5 + $0x170] sm:$0xff]
        %v477 = vld [vmem:[#allocation5 + $0x178] sm:$0xff]
        %v478 = vld [vmem:[#allocation5 + $0x180] sm:$0xff]
        %v479 = vld [vmem:[#allocation5 + $0x188] sm:$0xff]
        %v480 = vld [vmem:[#allocation5 + $0x190] sm:$0xff]
        %v481 = vld [vmem:[#allocation5 + $0x198] sm:$0xff]
        %v482 = vld [vmem:[#allocation5 + $0x1a0] sm:$0xff]
        %v483 = vld [vmem:[#allocation5 + $0x1a8] sm:$0xff]
        %v484 = vld [vmem:[#allocation5 + $0x1b0] sm:$0xff]
        %v485 = vld [vmem:[#allocation5 + $0x1b8] sm:$0xff]
        %v486 = vld [vmem:[#allocation5 + $0x1c0] sm:$0xff]
        %v487 = vld [vmem:[#allocation5 + $0x1c8] sm:$0xff]
        %v488 = vld [vmem:[#allocation5 + $0x1d0] sm:$0xff]
        %v489 = vld [vmem:[#allocation5 + $0x1d8] sm:$0xff]
        %v490 = vld [vmem:[#allocation5 + $0x1e0] sm:$0xff]
        %v491 = vld [vmem:[#allocation5 + $0x1e8] sm:$0xff]
        %v492 = vld [vmem:[#allocation5 + $0x1f0] sm:$0xff]
        %v493 = vld [vmem:[#allocation5 + $0x1f8] sm:$0xff]
        %v494 = vld [vmem:[#allocation5 + $0x200] sm:$0xff]
        %v495 = vld [vmem:[#allocation5 + $0x208] sm:$0xff]
        %v496 = vld [vmem:[#allocation5 + $0x210] sm:$0xff]
        %v497 = vld [vmem:[#allocation5 + $0x218] sm:$0xff]
        %v498 = vld [vmem:[#allocation5 + $0x220] sm:$0xff]
        %v499 = vld [vmem:[#allocation5 + $0x228] sm:$0xff]
        %v500 = vld [vmem:[#allocation5 + $0x230] sm:$0xff]
        %v501 = vld [vmem:[#allocation5 + $0x238] sm:$0xff]
        %v502 = vld [vmem:[#allocation5 + $0x240] sm:$0xff]
        %v503 = vld [vmem:[#allocation5 + $0x248] sm:$0xff]
        %v504 = vld [vmem:[#allocation5 + $0x250] sm:$0xff]
        %v505 = vld [vmem:[#allocation5 + $0x258] sm:$0xff]
        %v506 = vld [vmem:[#allocation5 + $0x260] sm:$0xff]
        %v507 = vld [vmem:[#allocation5 + $0x268] sm:$0xff]
        %v508 = vld [vmem:[#allocation5 + $0x270] sm:$0xff]
        %v509 = vld [vmem:[#allocation5 + $0x278] sm:$0xff]
        %v510 = vld [vmem:[#allocation5 + $0x280] sm:$0xff]
        %v511 = vld [vmem:[#allocation5 + $0x288] sm:$0xff]
        %v512 = vld [vmem:[#allocation5 + $0x290] sm:$0xff]
        %v513 = vld [vmem:[#allocation5 + $0x298] sm:$0xff]
        %v514 = vld [vmem:[#allocation5 + $0x2a0] sm:$0xff]
        %v515 = vld [vmem:[#allocation5 + $0x2a8] sm:$0xff]
        %v516 = vld [vmem:[#allocation5 + $0x2b0] sm:$0xff]
        %v517 = vld [vmem:[#allocation5 + $0x2b8] sm:$0xff]
        %v518 = vld [vmem:[#allocation5 + $0x2c0] sm:$0xff]
        %v519 = vld [vmem:[#allocation5 + $0x2c8] sm:$0xff]
        %v520 = vld [vmem:[#allocation5 + $0x2d0] sm:$0xff]
        %v521 = vld [vmem:[#allocation5 + $0x2d8] sm:$0xff]
        %v522 = vld [vmem:[#allocation5 + $0x2e0] sm:$0xff]
        %v523 = vld [vmem:[#allocation5 + $0x2e8] sm:$0xff]
        %v524 = vld [vmem:[#allocation5 + $0x2f0] sm:$0xff]
        %v525 = vld [vmem:[#allocation5 + $0x2f8] sm:$0xff]
        %v526 = vld [vmem:[%s4] sm:$0x3]
        %528 = vset.pattern.permute.xlu0 0
        %529 = vperm.xlu0 %528, %v426
        %v530 = vpop.permute.xlu0 %529
        %v533 = vlaneseq
        %v534 = vshrl.u32 %v533, 7
        %v535 = vsub.s32 0, %v534
        %v536 = vrot.slane %v526, %v535
        %v537 = vlaneseq
        %v538 = vshrl.u32 %v537, 7
        %v539 = vsub.s32 1, %v538
        %v540 = vrot.slane %v526, %v539
        %v543 = vmul.f32 %v530, %v536
        %v544 = vmul.f32 %v530, %v540
        %v548 = vunpack.c.l.b16 %v427
        %v549 = vunpack.c.h.b16 %v427
        %v550 = vunpack.c.l.b16 %v428
        %v551 = vunpack.c.h.b16 %v428
        %v552 = vunpack.c.l.b16 %v429
        %v553 = vunpack.c.h.b16 %v429
        %v554 = vpack.c.b16 %v548, %v548
        %v555 = vpack.c.b16 %v549, %v549
        %v556 = vpack.c.b16 %v550, %v550
        %v557 = vpack.c.b16 %v551, %v551
        %v558 = vpack.c.b16 %v552, %v552
        %v559 = vpack.c.b16 %v553, %v553
        %v662 = vunpack.c.l.b16 %v430
        %v663 = vunpack.c.h.b16 %v430
        %v664 = vunpack.c.l.b16 %v431
        %v665 = vunpack.c.h.b16 %v431
        %v666 = vunpack.c.l.b16 %v432
        %v667 = vunpack.c.h.b16 %v432
        %v668 = vunpack.c.l.b16 %v433
        %v669 = vunpack.c.h.b16 %v433
        %v670 = vunpack.c.l.b16 %v434
        %v671 = vunpack.c.h.b16 %v434
        %v672 = vunpack.c.l.b16 %v435
        %v673 = vunpack.c.h.b16 %v435
        %v674 = vunpack.c.l.b16 %v436
        %v675 = vunpack.c.h.b16 %v436
        %v676 = vunpack.c.l.b16 %v437
        %v677 = vunpack.c.h.b16 %v437
        %v678 = vunpack.c.l.b16 %v438
        %v679 = vunpack.c.h.b16 %v438
        %v680 = vunpack.c.l.b16 %v439
        %v681 = vunpack.c.h.b16 %v439
        %v682 = vunpack.c.l.b16 %v440
        %v683 = vunpack.c.h.b16 %v440
        %v684 = vunpack.c.l.b16 %v441
        %v685 = vunpack.c.h.b16 %v441
        %v686 = vunpack.c.l.b16 %v442
        %v687 = vunpack.c.h.b16 %v442
        %v688 = vunpack.c.l.b16 %v443
        %v689 = vunpack.c.h.b16 %v443
        %v690 = vunpack.c.l.b16 %v444
        %v691 = vunpack.c.h.b16 %v444
        %v692 = vunpack.c.l.b16 %v445
        %v693 = vunpack.c.h.b16 %v445
        %v694 = vunpack.c.l.b16 %v446
        %v695 = vunpack.c.h.b16 %v446
        %v696 = vunpack.c.l.b16 %v447
        %v697 = vunpack.c.h.b16 %v447
        %v698 = vunpack.c.l.b16 %v448
        %v699 = vunpack.c.h.b16 %v448
        %v700 = vunpack.c.l.b16 %v449
        %v701 = vunpack.c.h.b16 %v449
        %v702 = vunpack.c.l.b16 %v450
        %v703 = vunpack.c.h.b16 %v450
        %v704 = vunpack.c.l.b16 %v451
        %v705 = vunpack.c.h.b16 %v451
        %v706 = vunpack.c.l.b16 %v452
        %v707 = vunpack.c.h.b16 %v452
        %v708 = vunpack.c.l.b16 %v453
        %v709 = vunpack.c.h.b16 %v453
        %v710 = vunpack.c.l.b16 %v454
        %v711 = vunpack.c.h.b16 %v454
        %v712 = vunpack.c.l.b16 %v455
        %v713 = vunpack.c.h.b16 %v455
        %v714 = vunpack.c.l.b16 %v456
        %v715 = vunpack.c.h.b16 %v456
        %v716 = vunpack.c.l.b16 %v457
        %v717 = vunpack.c.h.b16 %v457
        %v718 = vunpack.c.l.b16 %v458
        %v719 = vunpack.c.h.b16 %v458
        %v720 = vunpack.c.l.b16 %v459
        %v721 = vunpack.c.h.b16 %v459
        %v722 = vunpack.c.l.b16 %v460
        %v723 = vunpack.c.h.b16 %v460
        %v724 = vunpack.c.l.b16 %v461
        %v725 = vunpack.c.h.b16 %v461
        %v726 = vunpack.c.l.b16 %v462
        %v727 = vunpack.c.h.b16 %v462
        %v728 = vunpack.c.l.b16 %v463
        %v729 = vunpack.c.h.b16 %v463
        %v730 = vunpack.c.l.b16 %v464
        %v731 = vunpack.c.h.b16 %v464
        %v732 = vunpack.c.l.b16 %v465
        %v733 = vunpack.c.h.b16 %v465
        %v734 = vunpack.c.l.b16 %v466
        %v735 = vunpack.c.h.b16 %v466
        %v736 = vunpack.c.l.b16 %v467
        %v737 = vunpack.c.h.b16 %v467
        %v738 = vunpack.c.l.b16 %v468
        %v739 = vunpack.c.h.b16 %v468
        %v740 = vunpack.c.l.b16 %v469
        %v741 = vunpack.c.h.b16 %v469
        %v742 = vunpack.c.l.b16 %v470
        %v743 = vunpack.c.h.b16 %v470
        %v744 = vunpack.c.l.b16 %v471
        %v745 = vunpack.c.h.b16 %v471
        %v746 = vunpack.c.l.b16 %v472
        %v747 = vunpack.c.h.b16 %v472
        %v748 = vunpack.c.l.b16 %v473
        %v749 = vunpack.c.h.b16 %v473
        %v750 = vunpack.c.l.b16 %v474
        %v751 = vunpack.c.h.b16 %v474
        %v752 = vunpack.c.l.b16 %v475
        %v753 = vunpack.c.h.b16 %v475
        %v754 = vunpack.c.l.b16 %v476
        %v755 = vunpack.c.h.b16 %v476
        %v756 = vunpack.c.l.b16 %v477
        %v757 = vunpack.c.h.b16 %v477
        %v758 = vunpack.c.l.b16 %v478
        %v759 = vunpack.c.h.b16 %v478
        %v760 = vunpack.c.l.b16 %v479
        %v761 = vunpack.c.h.b16 %v479
        %v762 = vunpack.c.l.b16 %v480
        %v763 = vunpack.c.h.b16 %v480
        %v764 = vunpack.c.l.b16 %v481
        %v765 = vunpack.c.h.b16 %v481
        %v766 = vunpack.c.l.b16 %v482
        %v767 = vunpack.c.h.b16 %v482
        %v768 = vunpack.c.l.b16 %v483
        %v769 = vunpack.c.h.b16 %v483
        %v770 = vunpack.c.l.b16 %v484
        %v771 = vunpack.c.h.b16 %v484
        %v772 = vunpack.c.l.b16 %v485
        %v773 = vunpack.c.h.b16 %v485
        %v774 = vunpack.c.l.b16 %v486
        %v775 = vunpack.c.h.b16 %v486
        %v776 = vunpack.c.l.b16 %v487
        %v777 = vunpack.c.h.b16 %v487
        %v778 = vunpack.c.l.b16 %v488
        %v779 = vunpack.c.h.b16 %v488
        %v780 = vunpack.c.l.b16 %v489
        %v781 = vunpack.c.h.b16 %v489
        %v782 = vunpack.c.l.b16 %v490
        %v783 = vunpack.c.h.b16 %v490
        %v784 = vunpack.c.l.b16 %v491
        %v785 = vunpack.c.h.b16 %v491
        %v786 = vunpack.c.l.b16 %v492
        %v787 = vunpack.c.h.b16 %v492
        %v788 = vunpack.c.l.b16 %v493
        %v789 = vunpack.c.h.b16 %v493
        %v790 = vunpack.c.l.b16 %v494
        %v791 = vunpack.c.h.b16 %v494
        %v792 = vunpack.c.l.b16 %v495
        %v793 = vunpack.c.h.b16 %v495
        %v794 = vunpack.c.l.b16 %v496
        %v795 = vunpack.c.h.b16 %v496
        %v796 = vunpack.c.l.b16 %v497
        %v797 = vunpack.c.h.b16 %v497
        %v798 = vunpack.c.l.b16 %v498
        %v799 = vunpack.c.h.b16 %v498
        %v800 = vunpack.c.l.b16 %v499
        %v801 = vunpack.c.h.b16 %v499
        %v802 = vunpack.c.l.b16 %v500
        %v803 = vunpack.c.h.b16 %v500
        %v804 = vunpack.c.l.b16 %v501
        %v805 = vunpack.c.h.b16 %v501
        %v806 = vunpack.c.l.b16 %v502
        %v807 = vunpack.c.h.b16 %v502
        %v808 = vunpack.c.l.b16 %v503
        %v809 = vunpack.c.h.b16 %v503
        %v810 = vunpack.c.l.b16 %v504
        %v811 = vunpack.c.h.b16 %v504
        %v812 = vunpack.c.l.b16 %v505
        %v813 = vunpack.c.h.b16 %v505
        %v814 = vunpack.c.l.b16 %v506
        %v815 = vunpack.c.h.b16 %v506
        %v816 = vunpack.c.l.b16 %v507
        %v817 = vunpack.c.h.b16 %v507
        %v818 = vunpack.c.l.b16 %v508
        %v819 = vunpack.c.h.b16 %v508
        %v820 = vunpack.c.l.b16 %v509
        %v821 = vunpack.c.h.b16 %v509
        %v822 = vunpack.c.l.b16 %v510
        %v823 = vunpack.c.h.b16 %v510
        %v824 = vunpack.c.l.b16 %v511
        %v825 = vunpack.c.h.b16 %v511
        %v826 = vunpack.c.l.b16 %v512
        %v827 = vunpack.c.h.b16 %v512
        %v828 = vunpack.c.l.b16 %v513
        %v829 = vunpack.c.h.b16 %v513
        %v830 = vunpack.c.l.b16 %v514
        %v831 = vunpack.c.h.b16 %v514
        %v832 = vunpack.c.l.b16 %v515
        %v833 = vunpack.c.h.b16 %v515
        %v834 = vunpack.c.l.b16 %v516
        %v835 = vunpack.c.h.b16 %v516
        %v836 = vunpack.c.l.b16 %v517
        %v837 = vunpack.c.h.b16 %v517
        %v838 = vunpack.c.l.b16 %v518
        %v839 = vunpack.c.h.b16 %v518
        %v840 = vunpack.c.l.b16 %v519
        %v841 = vunpack.c.h.b16 %v519
        %v842 = vunpack.c.l.b16 %v520
        %v843 = vunpack.c.h.b16 %v520
        %v844 = vunpack.c.l.b16 %v521
        %v845 = vunpack.c.h.b16 %v521
        %v846 = vunpack.c.l.b16 %v522
        %v847 = vunpack.c.h.b16 %v522
        %v848 = vunpack.c.l.b16 %v523
        %v849 = vunpack.c.h.b16 %v523
        %v850 = vunpack.c.l.b16 %v524
        %v851 = vunpack.c.h.b16 %v524
        %v852 = vunpack.c.l.b16 %v525
        %v853 = vunpack.c.h.b16 %v525
        %v854 = vpack.c.b16 %v664, %v662
        %v855 = vpack.c.b16 %v665, %v663
        %v856 = vpack.c.b16 %v668, %v666
        %v857 = vpack.c.b16 %v669, %v667
        %v858 = vpack.c.b16 %v672, %v670
        %v859 = vpack.c.b16 %v673, %v671
        %v860 = vpack.c.b16 %v676, %v674
        %v861 = vpack.c.b16 %v677, %v675
        %v862 = vpack.c.b16 %v680, %v678
        %v863 = vpack.c.b16 %v681, %v679
        %v864 = vpack.c.b16 %v684, %v682
        %v865 = vpack.c.b16 %v685, %v683
        %v866 = vpack.c.b16 %v688, %v686
        %v867 = vpack.c.b16 %v689, %v687
        %v868 = vpack.c.b16 %v692, %v690
        %v869 = vpack.c.b16 %v693, %v691
        %v870 = vpack.c.b16 %v696, %v694
        %v871 = vpack.c.b16 %v697, %v695
        %v872 = vpack.c.b16 %v700, %v698
        %v873 = vpack.c.b16 %v701, %v699
        %v874 = vpack.c.b16 %v704, %v702
        %v875 = vpack.c.b16 %v705, %v703
        %v876 = vpack.c.b16 %v708, %v706
        %v877 = vpack.c.b16 %v709, %v707
        %v878 = vpack.c.b16 %v712, %v710
        %v879 = vpack.c.b16 %v713, %v711
        %v880 = vpack.c.b16 %v716, %v714
        %v881 = vpack.c.b16 %v717, %v715
        %v882 = vpack.c.b16 %v720, %v718
        %v883 = vpack.c.b16 %v721, %v719
        %v884 = vpack.c.b16 %v724, %v722
        %v885 = vpack.c.b16 %v725, %v723
        %v886 = vpack.c.b16 %v728, %v726
        %v887 = vpack.c.b16 %v729, %v727
        %v888 = vpack.c.b16 %v732, %v730
        %v889 = vpack.c.b16 %v733, %v731
        %v890 = vpack.c.b16 %v736, %v734
        %v891 = vpack.c.b16 %v737, %v735
        %v892 = vpack.c.b16 %v740, %v738
        %v893 = vpack.c.b16 %v741, %v739
        %v894 = vpack.c.b16 %v744, %v742
        %v895 = vpack.c.b16 %v745, %v743
        %v896 = vpack.c.b16 %v748, %v746
        %v897 = vpack.c.b16 %v749, %v747
        %v898 = vpack.c.b16 %v752, %v750
        %v899 = vpack.c.b16 %v753, %v751
        %v900 = vpack.c.b16 %v756, %v754
        %v901 = vpack.c.b16 %v757, %v755
        %v902 = vpack.c.b16 %v760, %v758
        %v903 = vpack.c.b16 %v761, %v759
        %v904 = vpack.c.b16 %v764, %v762
        %v905 = vpack.c.b16 %v765, %v763
        %v906 = vpack.c.b16 %v768, %v766
        %v907 = vpack.c.b16 %v769, %v767
        %v908 = vpack.c.b16 %v772, %v770
        %v909 = vpack.c.b16 %v773, %v771
        %v910 = vpack.c.b16 %v776, %v774
        %v911 = vpack.c.b16 %v777, %v775
        %v912 = vpack.c.b16 %v780, %v778
        %v913 = vpack.c.b16 %v781, %v779
        %v914 = vpack.c.b16 %v784, %v782
        %v915 = vpack.c.b16 %v785, %v783
        %v916 = vpack.c.b16 %v788, %v786
        %v917 = vpack.c.b16 %v789, %v787
        %v918 = vpack.c.b16 %v792, %v790
        %v919 = vpack.c.b16 %v793, %v791
        %v920 = vpack.c.b16 %v796, %v794
        %v921 = vpack.c.b16 %v797, %v795
        %v922 = vpack.c.b16 %v800, %v798
        %v923 = vpack.c.b16 %v801, %v799
        %v924 = vpack.c.b16 %v804, %v802
        %v925 = vpack.c.b16 %v805, %v803
        %v926 = vpack.c.b16 %v808, %v806
        %v927 = vpack.c.b16 %v809, %v807
        %v928 = vpack.c.b16 %v812, %v810
        %v929 = vpack.c.b16 %v813, %v811
        %v930 = vpack.c.b16 %v816, %v814
        %v931 = vpack.c.b16 %v817, %v815
        %v932 = vpack.c.b16 %v820, %v818
        %v933 = vpack.c.b16 %v821, %v819
        %v934 = vpack.c.b16 %v824, %v822
        %v935 = vpack.c.b16 %v825, %v823
        %v936 = vpack.c.b16 %v828, %v826
        %v937 = vpack.c.b16 %v829, %v827
        %v938 = vpack.c.b16 %v832, %v830
        %v939 = vpack.c.b16 %v833, %v831
        %v940 = vpack.c.b16 %v836, %v834
        %v941 = vpack.c.b16 %v837, %v835
        %v942 = vpack.c.b16 %v840, %v838
        %v943 = vpack.c.b16 %v841, %v839
        %v944 = vpack.c.b16 %v844, %v842
        %v945 = vpack.c.b16 %v845, %v843
        %v946 = vpack.c.b16 %v848, %v846
        %v947 = vpack.c.b16 %v849, %v847
        %v948 = vpack.c.b16 %v852, %v850
        %v949 = vpack.c.b16 %v853, %v851
        %1046 = vmatprep.subr.bf16.mxu0 %v869
        %1047 = vmatpush1.bf16.msra.mxu0 %v868
        %1048 = vmatprep.subr.bf16.mxu0 %v867
        %1049 = vmatpush1.bf16.msra.mxu0 %v866
        %1050 = vmatprep.subr.bf16.mxu0 %v865
        %1051 = vmatpush1.bf16.msra.mxu0 %v864
        %1052 = vmatprep.subr.bf16.mxu0 %v863
        %1053 = vmatpush1.bf16.msra.mxu0 %v862
        %1054 = vmatprep.subr.bf16.mxu0 %v861
        %1055 = vmatpush1.bf16.msra.mxu0 %v860
        %1056 = vmatprep.subr.bf16.mxu0 %v859
        %1057 = vmatpush1.bf16.msra.mxu0 %v858
        %1058 = vmatprep.subr.bf16.mxu0 %v857
        %1059 = vmatpush1.bf16.msra.mxu0 %v856
        %1060 = vmatprep.subr.bf16.mxu0 %v855
        %1061 = vmatpush1.bf16.msra.mxu0 %v854
        %1062 = vmatprep.subr.bf16.mxu0 %v885
        %1063 = vmatpush2.bf16.msra.mxu0 %v884
        %1064 = vmatprep.subr.bf16.mxu0 %v883
        %1065 = vmatpush2.bf16.msra.mxu0 %v882
        %1066 = vmatprep.subr.bf16.mxu0 %v881
        %1067 = vmatpush2.bf16.msra.mxu0 %v880
        %1068 = vmatprep.subr.bf16.mxu0 %v879
        %1069 = vmatpush2.bf16.msra.mxu0 %v878
        %1070 = vmatprep.subr.bf16.mxu0 %v877
        %1071 = vmatpush2.bf16.msra.mxu0 %v876
        %1072 = vmatprep.subr.bf16.mxu0 %v875
        %1073 = vmatpush2.bf16.msra.mxu0 %v874
        %1074 = vmatprep.subr.bf16.mxu0 %v873
        %1075 = vmatpush2.bf16.msra.mxu0 %v872
        %1076 = vmatprep.subr.bf16.mxu0 %v871
        %1077 = vmatpush2.bf16.msra.mxu0 %v870
        %1078 = vmatprep.mubr.bf16.mxu0 %v555
        %1079 = vmatmul.mubr.bf16.gmra.mxu0 %v554
        %v1080 = vpop.f32.mrf.mxu0
        %v1081 = vadd.f32 %v543, %v1080
        %v1082 = vpop.f32.mrf.mxu0
        %v1083 = vadd.f32 %v544, %v1082
        %v1084 = vpop.f32.mrf.mxu0
        %v1085 = vpop.f32.mrf.mxu0
        %1086 = vdwg.mxu0
        %1087 = vmatprep.subr.bf16.mxu0 %v901
        %1088 = vmatpush1.bf16.msra.mxu0 %v900
        %1089 = vmatprep.subr.bf16.mxu0 %v899
        %1090 = vmatpush1.bf16.msra.mxu0 %v898
        %1091 = vmatprep.subr.bf16.mxu0 %v897
        %1092 = vmatpush1.bf16.msra.mxu0 %v896
        %1093 = vmatprep.subr.bf16.mxu0 %v895
        %1094 = vmatpush1.bf16.msra.mxu0 %v894
        %1095 = vmatprep.subr.bf16.mxu0 %v893
        %1096 = vmatpush1.bf16.msra.mxu0 %v892
        %1097 = vmatprep.subr.bf16.mxu0 %v891
        %1098 = vmatpush1.bf16.msra.mxu0 %v890
        %1099 = vmatprep.subr.bf16.mxu0 %v889
        %1100 = vmatpush1.bf16.msra.mxu0 %v888
        %1101 = vmatprep.subr.bf16.mxu0 %v887
        %1102 = vmatpush1.bf16.msra.mxu0 %v886
        %1103 = vmatprep.subr.bf16.mxu0 %v917
        %1104 = vmatpush2.bf16.msra.mxu0 %v916
        %1105 = vmatprep.subr.bf16.mxu0 %v915
        %1106 = vmatpush2.bf16.msra.mxu0 %v914
        %1107 = vmatprep.subr.bf16.mxu0 %v913
        %1108 = vmatpush2.bf16.msra.mxu0 %v912
        %1109 = vmatprep.subr.bf16.mxu0 %v911
        %1110 = vmatpush2.bf16.msra.mxu0 %v910
        %1111 = vmatprep.subr.bf16.mxu0 %v909
        %1112 = vmatpush2.bf16.msra.mxu0 %v908
        %1113 = vmatprep.subr.bf16.mxu0 %v907
        %1114 = vmatpush2.bf16.msra.mxu0 %v906
        %1115 = vmatprep.subr.bf16.mxu0 %v905
        %1116 = vmatpush2.bf16.msra.mxu0 %v904
        %1117 = vmatprep.subr.bf16.mxu0 %v903
        %1118 = vmatpush2.bf16.msra.mxu0 %v902
        %1119 = vmatprep.mubr.bf16.mxu0 %v557
        %1120 = vmatmul.mubr.bf16.gmra.mxu0 %v556
        %v1121 = vpop.f32.mrf.mxu0
        %v1122 = vadd.f32 %v1081, %v1121
        %v1123 = vpop.f32.mrf.mxu0
        %v1124 = vadd.f32 %v1083, %v1123
        %v1125 = vpop.f32.mrf.mxu0
        %v1126 = vpop.f32.mrf.mxu0
        %1127 = vdwg.mxu0
        %1128 = vmatprep.subr.bf16.mxu0 %v933
        %1129 = vmatpush1.bf16.msra.mxu0 %v932
        %1130 = vmatprep.subr.bf16.mxu0 %v931
        %1131 = vmatpush1.bf16.msra.mxu0 %v930
        %1132 = vmatprep.subr.bf16.mxu0 %v929
        %1133 = vmatpush1.bf16.msra.mxu0 %v928
        %1134 = vmatprep.subr.bf16.mxu0 %v927
        %1135 = vmatpush1.bf16.msra.mxu0 %v926
        %1136 = vmatprep.subr.bf16.mxu0 %v925
        %1137 = vmatpush1.bf16.msra.mxu0 %v924
        %1138 = vmatprep.subr.bf16.mxu0 %v923
        %1139 = vmatpush1.bf16.msra.mxu0 %v922
        %1140 = vmatprep.subr.bf16.mxu0 %v921
        %1141 = vmatpush1.bf16.msra.mxu0 %v920
        %1142 = vmatprep.subr.bf16.mxu0 %v919
        %1143 = vmatpush1.bf16.msra.mxu0 %v918
        %1144 = vmatprep.subr.bf16.mxu0 %v949
        %1145 = vmatpush2.bf16.msra.mxu0 %v948
        %1146 = vmatprep.subr.bf16.mxu0 %v947
        %1147 = vmatpush2.bf16.msra.mxu0 %v946
        %1148 = vmatprep.subr.bf16.mxu0 %v945
        %1149 = vmatpush2.bf16.msra.mxu0 %v944
        %1150 = vmatprep.subr.bf16.mxu0 %v943
        %1151 = vmatpush2.bf16.msra.mxu0 %v942
        %1152 = vmatprep.subr.bf16.mxu0 %v941
        %1153 = vmatpush2.bf16.msra.mxu0 %v940
        %1154 = vmatprep.subr.bf16.mxu0 %v939
        %1155 = vmatpush2.bf16.msra.mxu0 %v938
        %1156 = vmatprep.subr.bf16.mxu0 %v937
        %1157 = vmatpush2.bf16.msra.mxu0 %v936
        %1158 = vmatprep.subr.bf16.mxu0 %v935
        %1159 = vmatpush2.bf16.msra.mxu0 %v934
        %1160 = vmatprep.mubr.bf16.mxu0 %v559
        %1161 = vmatmul.mubr.bf16.gmra.mxu0 %v558
        %v1162 = vpop.f32.mrf.mxu0
        %v1163 = vadd.f32 %v1122, %v1162
        %v1164 = vpop.f32.mrf.mxu0
        %v1165 = vadd.f32 %v1124, %v1164
        %v1166 = vpop.f32.mrf.mxu0
        %v1167 = vpop.f32.mrf.mxu0
        %1168 = vdwg.mxu0
        %v1169 = vld [vmem:[%s5] sm:$0x3]
        %v1171 = vlaneseq
        %v1172 = vshrl.u32 %v1171, 7
        %v1173 = vsub.s32 0, %v1172
        %v1174 = vrot.slane %v1169, %v1173
        %v1175 = vlaneseq
        %v1176 = vshrl.u32 %v1175, 7
        %v1177 = vsub.s32 1, %v1176
        %v1178 = vrot.slane %v1169, %v1177
        %v1181 = vadd.f32 %v1163, %v1174
        %v1182 = vadd.f32 %v1165, %v1178
        %v1183 = vmax.f32 %v1181, 0.0
        %v1184 = vmax.f32 %v1182, 0.0
        %v1185 = vpack.c.bf16 %v1183, %v1183
        %v1186 = vpack.c.bf16 %v1184, %v1184
        %v1187 = vld [vmem:[#allocation7] sm:$0xf]
        %v1188 = vld [vmem:[#allocation7 + $0x4] sm:$0xf]
        %v1189 = vld [vmem:[#allocation7 + $0x8] sm:$0xf]
        %v1190 = vld [vmem:[#allocation7 + $0xc] sm:$0xf]
        %v1191 = vld [vmem:[#allocation7 + $0x10] sm:$0xf]
        %v1192 = vld [vmem:[#allocation7 + $0x14] sm:$0xf]
        %v1193 = vld [vmem:[#allocation7 + $0x18] sm:$0xf]
        %v1194 = vld [vmem:[#allocation7 + $0x1c] sm:$0xf]
        %v1195 = vld [vmem:[#allocation7 + $0x20] sm:$0xf]
        %v1196 = vld [vmem:[#allocation7 + $0x24] sm:$0xf]
        %v1197 = vld [vmem:[#allocation7 + $0x28] sm:$0xf]
        %v1198 = vld [vmem:[#allocation7 + $0x2c] sm:$0xf]
        %v1199 = vld [vmem:[#allocation7 + $0x30] sm:$0xf]
        %v1200 = vld [vmem:[#allocation7 + $0x34] sm:$0xf]
        %v1201 = vld [vmem:[#allocation7 + $0x38] sm:$0xf]
        %v1202 = vld [vmem:[#allocation7 + $0x3c] sm:$0xf]
        %v1203 = vld [vmem:[#allocation7 + $0x40] sm:$0xf]
        %v1204 = vld [vmem:[#allocation7 + $0x44] sm:$0xf]
        %v1205 = vld [vmem:[#allocation7 + $0x48] sm:$0xf]
        %v1206 = vld [vmem:[#allocation7 + $0x4c] sm:$0xf]
        %v1207 = vld [vmem:[#allocation7 + $0x50] sm:$0xf]
        %v1208 = vld [vmem:[#allocation7 + $0x54] sm:$0xf]
        %v1209 = vld [vmem:[#allocation7 + $0x58] sm:$0xf]
        %v1210 = vld [vmem:[#allocation7 + $0x5c] sm:$0xf]
        %v1211 = vld [vmem:[#allocation7 + $0x60] sm:$0xf]
        %v1212 = vld [vmem:[#allocation7 + $0x64] sm:$0xf]
        %v1213 = vld [vmem:[#allocation7 + $0x68] sm:$0xf]
        %v1214 = vld [vmem:[#allocation7 + $0x6c] sm:$0xf]
        %v1215 = vld [vmem:[#allocation7 + $0x70] sm:$0xf]
        %v1216 = vld [vmem:[#allocation7 + $0x74] sm:$0xf]
        %v1217 = vld [vmem:[#allocation7 + $0x78] sm:$0xf]
        %v1218 = vld [vmem:[#allocation7 + $0x7c] sm:$0xf]
        %v1219 = vld [vmem:[%s7] sm:$0x1]
        %v1221 = vlaneseq
        %v1222 = vshrl.u32 %v1221, 7
        %v1223 = vsub.s32 0, %v1222
        %v1224 = vrot.slane %v1219, %v1223
        %v1258 = vunpack.c.l.b16 %v1187
        %v1259 = vunpack.c.l.b16 %v1188
        %v1260 = vunpack.c.l.b16 %v1189
        %v1261 = vunpack.c.l.b16 %v1190
        %v1262 = vunpack.c.l.b16 %v1191
        %v1263 = vunpack.c.l.b16 %v1192
        %v1264 = vunpack.c.l.b16 %v1193
        %v1265 = vunpack.c.l.b16 %v1194
        %v1266 = vunpack.c.l.b16 %v1195
        %v1267 = vunpack.c.l.b16 %v1196
        %v1268 = vunpack.c.l.b16 %v1197
        %v1269 = vunpack.c.l.b16 %v1198
        %v1270 = vunpack.c.l.b16 %v1199
        %v1271 = vunpack.c.l.b16 %v1200
        %v1272 = vunpack.c.l.b16 %v1201
        %v1273 = vunpack.c.l.b16 %v1202
        %v1274 = vunpack.c.l.b16 %v1203
        %v1275 = vunpack.c.l.b16 %v1204
        %v1276 = vunpack.c.l.b16 %v1205
        %v1277 = vunpack.c.l.b16 %v1206
        %v1278 = vunpack.c.l.b16 %v1207
        %v1279 = vunpack.c.l.b16 %v1208
        %v1280 = vunpack.c.l.b16 %v1209
        %v1281 = vunpack.c.l.b16 %v1210
        %v1282 = vunpack.c.l.b16 %v1211
        %v1283 = vunpack.c.l.b16 %v1212
        %v1284 = vunpack.c.l.b16 %v1213
        %v1285 = vunpack.c.l.b16 %v1214
        %v1286 = vunpack.c.l.b16 %v1215
        %v1287 = vunpack.c.l.b16 %v1216
        %v1288 = vunpack.c.l.b16 %v1217
        %v1289 = vunpack.c.l.b16 %v1218
        %v1290 = vpack.c.b16 %v1259, %v1258
        %v1291 = vpack.c.b16 %v1261, %v1260
        %v1292 = vpack.c.b16 %v1263, %v1262
        %v1293 = vpack.c.b16 %v1265, %v1264
        %v1294 = vpack.c.b16 %v1267, %v1266
        %v1295 = vpack.c.b16 %v1269, %v1268
        %v1296 = vpack.c.b16 %v1271, %v1270
        %v1297 = vpack.c.b16 %v1273, %v1272
        %v1298 = vpack.c.b16 %v1275, %v1274
        %v1299 = vpack.c.b16 %v1277, %v1276
        %v1300 = vpack.c.b16 %v1279, %v1278
        %v1301 = vpack.c.b16 %v1281, %v1280
        %v1302 = vpack.c.b16 %v1283, %v1282
        %v1303 = vpack.c.b16 %v1285, %v1284
        %v1304 = vpack.c.b16 %v1287, %v1286
        %v1305 = vpack.c.b16 %v1289, %v1288
        %1322 = vmatprep.subr.bf16.mxu0 0
        %1323 = vmatpush1.bf16.msra.mxu0 %v1297
        %1324 = vmatprep.subr.bf16.mxu0 0
        %1325 = vmatpush1.bf16.msra.mxu0 %v1296
        %1326 = vmatprep.subr.bf16.mxu0 0
        %1327 = vmatpush1.bf16.msra.mxu0 %v1295
        %1328 = vmatprep.subr.bf16.mxu0 0
        %1329 = vmatpush1.bf16.msra.mxu0 %v1294
        %1330 = vmatprep.subr.bf16.mxu0 0
        %1331 = vmatpush1.bf16.msra.mxu0 %v1293
        %1332 = vmatprep.subr.bf16.mxu0 0
        %1333 = vmatpush1.bf16.msra.mxu0 %v1292
        %1334 = vmatprep.subr.bf16.mxu0 0
        %1335 = vmatpush1.bf16.msra.mxu0 %v1291
        %1336 = vmatprep.subr.bf16.mxu0 0
        %1337 = vmatpush1.bf16.msra.mxu0 %v1290
        %1338 = vmatprep.subr.bf16.mxu0 0
        %1339 = vmatpush2.bf16.msra.mxu0 %v1305
        %1340 = vmatprep.subr.bf16.mxu0 0
        %1341 = vmatpush2.bf16.msra.mxu0 %v1304
        %1342 = vmatprep.subr.bf16.mxu0 0
        %1343 = vmatpush2.bf16.msra.mxu0 %v1303
        %1344 = vmatprep.subr.bf16.mxu0 0
        %1345 = vmatpush2.bf16.msra.mxu0 %v1302
        %1346 = vmatprep.subr.bf16.mxu0 0
        %1347 = vmatpush2.bf16.msra.mxu0 %v1301
        %1348 = vmatprep.subr.bf16.mxu0 0
        %1349 = vmatpush2.bf16.msra.mxu0 %v1300
        %1350 = vmatprep.subr.bf16.mxu0 0
        %1351 = vmatpush2.bf16.msra.mxu0 %v1299
        %1352 = vmatprep.subr.bf16.mxu0 0
        %1353 = vmatpush2.bf16.msra.mxu0 %v1298
        %1354 = vmatprep.mubr.bf16.mxu0 %v1186
        %1355 = vmatmul.mubr.bf16.gmra.mxu0 %v1185
        %v1356 = vpop.f32.mrf.mxu0
        %v1357 = vadd.f32 %v1224, %v1356
        %v1358 = vpop.f32.mrf.mxu0
        %v1359 = vpop.f32.mrf.mxu0
        %v1360 = vpop.f32.mrf.mxu0
        %1361 = vdwg.mxu0
        %1362 = vst [vmem:[%s404] sm:$0xff] %v1357
        %1363 = vmax.xlane.f32.xlu0 %v1357
        %v1364 = vpop.xlane.xlu0 %1363
        %v1365 = vsub.f32 %v1357, %v1364
        %v1366 = vmul.f32 %v1365, 1.442695
        %v1367 = vpow.pop %v1366
        %1368 = vadd.xlane.f32.xlu0 %v1367
        %v1369 = vpop.xlane.xlu0 %1368
        %v1370 = vlog2.pop %v1369
        %v1371 = vmul.f32 %v1370, 0.6931472
        %v1372 = vadd.f32 %v1371, %v1364
        %v1373 = vlaneseq
        %v1374 = vand.u32 %v1373, 127
        %v1375 = vld [vmem:[%s418] sm:$0xff]
        %1376 = vset.pattern.permute.xlu0 0
        %1377 = vperm.xlu0 %1376, %v1375
        %v1378 = vpop.permute.xlu0 %1377
        %vm1379 = vcmp.eq.s32.totalorder %v1374, %v1378
        %v1380 = vsel %vm1379, %v1357, 0.0
        %1381 = vadd.xlane.f32.xlu0 %v1380
        %v1382 = vpop.xlane.xlu0 %1381
        %v1383 = vsub.f32 %v1372, %v1382
        %vm1384 = vcmask 7168
        %1385 = vst.msk [vmem:[%s422] sm:$0xff] %vm1384, %v1383
        %s1386 = sand.u32 %s219, 1
        %s1387 = scalar_lea.sflag [#allocation4], %s1386
        %s1388 = sand.u32 %s219, 1
        %s1389 = smul.addr %s1388, 8
        %s1390 = scalar_lea.vmem [#allocation8], %s1389
        %p1391 = scmp.lt.s32.totalorder %s28, 3
        %s1392 = scalar_select %p1391, %s28, 3
        %s1393 = smul.addr %s1392, 8
        %s1394 = scalar_lea.vmem %s9, %s1393
        // Predicated region
        $region65: #{tpu_custom_call.1} parent=51 // pred_check
          %p1395 = pneg %p229
        $region66: #{tpu_custom_call.1} parent=51 // pred_check_branch
          %1397 = sbr.rel (%p1395) target = $region68
        $region67: #{tpu_custom_call.1} parent=51 // pred_region
          %s1399 = ssub.s32 128, 128
          %1400 = vsyncadd %s1387, %s1399
          %s1401 = smul.addr %s28, 128
          %s1402 = scalar_lea.hbm %s8, %s1401
          %s1404 = sshll.u32 %s1390, 4
          %s1405 = int_to_ptr.vmem [resolvable:$true] %s1404
          %1407 = dma.vmem_to_hbm [thread:$0]  %s1405, 128, %s1402, %s1387
        $region68: #{tpu_custom_call.1} parent=51 // pred_fallthru
          _
        // Predicated region
        $region69: #{tpu_custom_call.1} parent=51 // pred_check
          %p1408 = pneg %p255
        $region70: #{tpu_custom_call.1} parent=51 // pred_check_branch
          %1410 = sbr.rel (%p1408) target = $region72
        $region71: #{tpu_custom_call.1} parent=51 // pred_region
          _
        $region72: #{tpu_custom_call.1} parent=51 // pred_fallthru
          _
      $region52: #{tpu_custom_call.1} parent=5 // pred_fallthru
        _
      %p1411 = scmp.le.s32.totalorder 2, %s23
      // Predicated region
      $region73: #{tpu_custom_call.1} parent=5 // pred_check
        %p1412 = pneg %p1411
      $region74: #{tpu_custom_call.1} parent=5 // pred_check_branch
        %1414 = sbr.rel (%p1412) target = $region76
      $region75: #{tpu_custom_call.1} parent=5 // pred_region
        %s1415 = ssub.s32 %s23, 2
        // Predicated region
        $region77: #{tpu_custom_call.1} parent=75 // pred_check
          %p1416 = pneg %p235
        $region78: #{tpu_custom_call.1} parent=75 // pred_check_branch
          %1418 = sbr.rel (%p1416) target = $region80
        $region79: #{tpu_custom_call.1} parent=75 // pred_region
          %s1419 = sand.u32 %s220, 1
          %s1420 = scalar_lea.sflag [#allocation4], %s1419
          %s1421 = sand.u32 %s220, 1
          %s1422 = smul.addr %s1421, 8
          %s1423 = scalar_lea.vmem [#allocation8], %s1422
          %1424 = dma.done %s1420, 128
        $region80: #{tpu_custom_call.1} parent=75 // pred_fallthru
          _
        // Predicated region
        $region81: #{tpu_custom_call.1} parent=75 // pred_check
          %p1425 = pneg %p261
        $region82: #{tpu_custom_call.1} parent=75 // pred_check_branch
          %1427 = sbr.rel (%p1425) target = $region84
        $region83: #{tpu_custom_call.1} parent=75 // pred_region
          %p1428 = scmp.lt.s32.totalorder %s29, 3
          %s1429 = scalar_select %p1428, %s29, 3
          %s1430 = smul.addr %s1429, 8
          %s1431 = scalar_lea.vmem %s9, %s1430
        $region84: #{tpu_custom_call.1} parent=75 // pred_fallthru
          _
      $region76: #{tpu_custom_call.1} parent=5 // pred_fallthru
        _
    $region6: #{tpu_custom_call.1} parent=1 // loop_footer
      %s27 = sadd.s32 1, %s23
    $region7: #{tpu_custom_call.1} parent=1 // loop_footer_branch
      %22 = sbr.rel target = $region3
    $region8: #{tpu_custom_call.1} parent=1 // loop_exit
      _
    %1432 = vsyncpa [#allocation3], 1
    %s1433 = scalar_lea.sflag [#allocation3], 1
    %1434 = vsyncpa %s1433, 1
    %1435 = vsyncpa [#allocation6], 1
    %1436 = vsyncpa [#allocation4], 1
    %s1437 = scalar_lea.sflag [#allocation4], 1
    %1438 = vsyncpa %s1437, 1

</llo_original>
